<compile_context>
chip_gen: v7x
topology: tpu7x:2x2x1
jax: 0.10.0
libtpu: 0.0.40
codegen_flags: <defaults>
</compile_context>

<pallas_src>
import jax
import jax.numpy as jnp
from jax.experimental import pallas as pl
from jax.experimental.pallas import tpu as pltpu

# --- synthetic config (small shapes) -------------------------------------------------
INPUT_DIM = 3        # per-point input channels (Conv1d in_channels)
H1, H2 = 64, 128     # shared-MLP widths
TRAJ_LATENT = 32     # config.traj_latent_size (pooled latent returned by forward)
EXTRA_PRED = 4       # extra_feat_pred head width
N_POINTS = 64
BATCH = 2

K1 = 8               # padded layer-1 contraction dim: [x0, x1, x2, 1(bias), 0, 0, 0, 0]
OUT_W = 128          # lane-dense packed output width: [latent(32) | extra(4) | zeros]

# Packed-parameter row layout (all blocks padded to 128 lanes / K=128 rows so every
# matmul is one unmasked MXU push and the kernel takes only 2 operands).
ROW_W1 = 0                  # (8,128)   rows 0:3 = w1, row 3 = b1 (ones-column fold)
ROW_W2 = ROW_W1 + K1        # (128,128) rows 0:64 = w2, rest 0
ROW_W3 = ROW_W2 + 128       # (128,128) cols 0:32 = w3, rest 0
ROW_W4 = ROW_W3 + 128       # (128,128) rows 0:32 x cols 32:36 = w4 (L,E), rest 0
ROW_B = ROW_W4 + 128        # 8-row bias tile: row 0 = b2, row 1 = [b3 | b4 | 0]
PACK_ROWS = ROW_B + 8       # 400 rows total (multiple of 8)

assert TRAJ_LATENT + EXTRA_PRED <= OUT_W and H2 == OUT_W and H1 <= 128


def pack_params(params):
    """Pack all weights/biases into one (400, 128) f32 slab (call once, outside jit)."""
    w1, b1, w2, b2, w3, b3, w4t, b4 = params
    L, E = TRAJ_LATENT, EXTRA_PRED
    p = jnp.zeros((PACK_ROWS, OUT_W), jnp.float32)
    p = p.at[ROW_W1:ROW_W1 + INPUT_DIM, 0:H1].set(w1)        # w1
    p = p.at[ROW_W1 + INPUT_DIM, 0:H1].set(b1[0])            # b1 via ones column of x
    p = p.at[ROW_W2:ROW_W2 + H1, :].set(w2)                  # w2 (K padded with 0 rows)
    p = p.at[ROW_W3:ROW_W3 + H2, 0:L].set(w3)                # w3 (N padded with 0 cols)
    p = p.at[ROW_W4:ROW_W4 + L, L:L + E].set(w4t.T)          # w4 -> lanes 32:36
    p = p.at[ROW_B, :].set(b2[0])                            # b2 row
    p = p.at[ROW_B + 1, 0:L].set(b3[0])                      # b3 | b4 combined row
    p = p.at[ROW_B + 1, L:L + E].set(b4[0])
    return p


def traj_sampler_forward(curr_point_state_ncl, packed_params):
    """Mirrors TrajSamplerNet.forward: returns (latent, None, None, extra_pred)."""
    B, C, N = curr_point_state_ncl.shape
    L, E = TRAJ_LATENT, EXTRA_PRED

    # NCL -> (B*N, K1): channels on lanes, batch*points on sublanes; ones column at
    # index C folds b1 into the layer-1 matmul; zero-pad up to K1 = 8.  With
    # allow_input_fusion this repack fuses into the custom-call operand.
    x2d = jnp.transpose(curr_point_state_ncl, (0, 2, 1)).reshape(B * N, C)
    x_pad = jnp.concatenate(
        [x2d,
         jnp.ones((B * N, 1), jnp.float32),
         jnp.zeros((B * N, K1 - C - 1), jnp.float32)], axis=-1)           # (B*N, 8)

    def encoder_kernel(x_ref, p_ref, out_ref):
        x = x_ref[...]                                                    # (B*N, 8)

        # Layer 1 on the MXU (bias folded via the ones column); cols 64:128 are 0.
        h = jnp.maximum(
            jnp.dot(x, p_ref[ROW_W1:ROW_W1 + K1, :],
                    preferred_element_type=jnp.float32), 0.0)             # (B*N, 128)

        # One aligned tile load for both bias rows.
        btile = p_ref[ROW_B:ROW_B + 8, :]                                 # (8, 128)
        b2_row = btile[0:1, :]
        b34_row = btile[1:2, :]                                           # [b3 | b4 | 0]

        # Layer 2: K padded to 128 with zero rows (zero h-cols contribute nothing).
        h = jnp.maximum(
            jnp.dot(h, p_ref[ROW_W2:ROW_W2 + 128, :],
                    preferred_element_type=jnp.float32) + b2_row, 0.0)    # (B*N, 128)

        # Layer 3: output padded 32 -> 128 with zero columns; b3 added after pooling
        # (max over points commutes with a per-column constant).
        h = jnp.dot(h, p_ref[ROW_W3:ROW_W3 + 128, :],
                    preferred_element_type=jnp.float32)                   # (B*N, 128)

        # Per-batch max pool over points.  N = 64 rows per batch = 8 full sublane
        # tiles, so this leading-dim split is tile-aligned (free, no relayout).
        pooled = jnp.max(h.reshape(B, N, OUT_W), axis=1)                  # (B, 128)
        pooled = pooled + b34_row     # lanes 0:32 += b3; lanes 32:36 = b4; rest stay 0

        # Extra head on the (otherwise idle) MXU: W4 block is nonzero only in rows
        # 0:32 x cols 32:36, so this push drops extra_feat_pred into lanes 32:36 and
        # zeros everywhere else (the b4 values already in lanes 32:36 hit zero rows).
        extra = jnp.dot(pooled, p_ref[ROW_W4:ROW_W4 + 128, :],
                        preferred_element_type=jnp.float32)               # (B, 128)

        # Single unmasked lane-dense store: [latent | extra_feat_pred | zeros].
        out_ref[...] = pooled + extra

    flops = 2 * B * N * (K1 * OUT_W + 2 * OUT_W * OUT_W) + 2 * B * OUT_W * OUT_W
    bytes_accessed = 4 * (B * N * K1 + PACK_ROWS * OUT_W + B * OUT_W)

    packed_out = pl.pallas_call(
        encoder_kernel,
        out_shape=jax.ShapeDtypeStruct((B, OUT_W), jnp.float32),
        in_specs=[pl.BlockSpec(memory_space=pltpu.MemorySpace.VMEM)] * 2,
        out_specs=pl.BlockSpec(memory_space=pltpu.MemorySpace.VMEM),
        compiler_params=pltpu.CompilerParams(allow_input_fusion=[True, False]),
        cost_estimate=pl.CostEstimate(flops=flops, transcendentals=0,
                                      bytes_accessed=bytes_accessed),
    )(x_pad, packed_params)

    traj_sampler_latent = packed_out[:, 0:L]
    extra_feat_pred = packed_out[:, L:L + E]
    return traj_sampler_latent, None, None, extra_feat_pred


# --- deterministic parameter init (mimics weights_init_: xavier_uniform, zero bias) ---
def _xavier(key, shape):
    fan_in, fan_out = shape
    bound = (6.0 / (fan_in + fan_out)) ** 0.5
    return jax.random.uniform(key, shape, jnp.float32, -bound, bound)


def init_params(key):
    k1, k2, k3, k4 = jax.random.split(key, 4)
    w1 = _xavier(k1, (INPUT_DIM, H1));            b1 = jnp.zeros((1, H1), jnp.float32)
    w2 = _xavier(k2, (H1, H2));                   b2 = jnp.zeros((1, H2), jnp.float32)
    w3 = _xavier(k3, (H2, TRAJ_LATENT));          b3 = jnp.zeros((1, TRAJ_LATENT), jnp.float32)
    # extra head stored as (E, L), matching the PyTorch nn.Linear weight layout.
    w4t = _xavier(k4, (EXTRA_PRED, TRAJ_LATENT)); b4 = jnp.zeros((1, EXTRA_PRED), jnp.float32)
    return (w1, b1, w2, b2, w3, b3, w4t, b4)


# --- pure-JAX reference for correctness -----------------------------------------------
def _reference(curr_point_state_ncl, params):
    w1, b1, w2, b2, w3, b3, w4t, b4 = params
    x = jnp.transpose(curr_point_state_ncl, (0, 2, 1))    # (B, N, C)
    h = jax.nn.relu(x @ w1 + b1)
    h = jax.nn.relu(h @ w2 + b2)
    h = h @ w3 + b3
    pooled = jnp.max(h, axis=1)
    return pooled, pooled @ w4t.T + b4


if __name__ == "__main__":
    key = jax.random.PRNGKey(0)
    kx, kp = jax.random.split(key)
    # curr_point_state in PyTorch Conv1d layout: (B, C=input_dim, N points)
    x = jax.random.normal(kx, (BATCH, INPUT_DIM, N_POINTS), jnp.float32)
    params = init_params(kp)
    packed_params = pack_params(params)           # one-time host-side packing

    fwd = jax.jit(traj_sampler_forward)
    lat, _, _, extra = fwd(x, packed_params)
    jax.block_until_ready((lat, extra))

    ref_lat, ref_extra = _reference(x, params)
    assert lat.shape == (BATCH, TRAJ_LATENT) and extra.shape == (BATCH, EXTRA_PRED)
    assert jnp.allclose(lat, ref_lat, atol=1e-4, rtol=1e-4)
    assert jnp.allclose(extra, ref_extra, atol=1e-4, rtol=1e-4)
    print("KERNEL_OK")
</pallas_src>

<mosaic_0001>
module attributes {stable_mosaic.version = 11 : i64} {
  func.func @encoder_kernel(%arg0: memref<128x8xf32, #tpu.memory_space<vmem>>, %arg1: memref<400x128xf32, #tpu.memory_space<vmem>>, %arg2: memref<2x128xf32, #tpu.memory_space<vmem>>) attributes {dimension_semantics = [], scalar_prefetch = 0 : i64, scratch_operands = 0 : i64, tpu.core_type = #tpu.core_type<tc>} {
    %c0 = arith.constant 0 : index
    %c0_0 = arith.constant 0 : index
    %0 = vector.load %arg0[%c0, %c0_0] : memref<128x8xf32, #tpu.memory_space<vmem>>, vector<128x8xf32>
    %c0_1 = arith.constant 0 : index
    %c0_2 = arith.constant 0 : index
    %1 = vector.load %arg1[%c0_1, %c0_2] : memref<400x128xf32, #tpu.memory_space<vmem>>, vector<8x128xf32>
    %cst = arith.constant dense<0.000000e+00> : vector<128x128xf32>
    %2 = tpu.matmul %0, %1, %cst {dimension_numbers = #tpu.dot_dimension_numbers<[1], [0], [0], [1], [0, 0, 1, 1], [], []>} : vector<128x8xf32>, vector<8x128xf32>, vector<128x128xf32> -> vector<128x128xf32>
    %cst_3 = arith.constant 0.000000e+00 : f32
    %3 = vector.broadcast %cst_3 : f32 to vector<128x128xf32>
    %4 = arith.maximumf %2, %3 : vector<128x128xf32>
    %c392 = arith.constant 392 : index
    %c0_4 = arith.constant 0 : index
    %5 = vector.load %arg1[%c392, %c0_4] : memref<400x128xf32, #tpu.memory_space<vmem>>, vector<8x128xf32>
    %6 = vector.extract_strided_slice %5 {offsets = [0, 0], sizes = [1, 128], strides = [1, 1]} : vector<8x128xf32> to vector<1x128xf32>
    %7 = vector.extract_strided_slice %5 {offsets = [1, 0], sizes = [1, 128], strides = [1, 1]} : vector<8x128xf32> to vector<1x128xf32>
    %c8 = arith.constant 8 : index
    %c0_5 = arith.constant 0 : index
    %8 = vector.load %arg1[%c8, %c0_5] : memref<400x128xf32, #tpu.memory_space<vmem>>, vector<128x128xf32>
    %cst_6 = arith.constant dense<0.000000e+00> : vector<128x128xf32>
    %9 = tpu.matmul %4, %8, %cst_6 {dimension_numbers = #tpu.dot_dimension_numbers<[1], [0], [0], [1], [0, 0, 1, 1], [], []>} : vector<128x128xf32>, vector<128x128xf32>, vector<128x128xf32> -> vector<128x128xf32>
    %10 = vector.broadcast %6 : vector<1x128xf32> to vector<128x128xf32>
    %11 = arith.addf %9, %10 : vector<128x128xf32>
    %cst_7 = arith.constant 0.000000e+00 : f32
    %12 = vector.broadcast %cst_7 : f32 to vector<128x128xf32>
    %13 = arith.maximumf %11, %12 : vector<128x128xf32>
    %c136 = arith.constant 136 : index
    %c0_8 = arith.constant 0 : index
    %14 = vector.load %arg1[%c136, %c0_8] : memref<400x128xf32, #tpu.memory_space<vmem>>, vector<128x128xf32>
    %cst_9 = arith.constant dense<0.000000e+00> : vector<128x128xf32>
    %15 = tpu.matmul %13, %14, %cst_9 {dimension_numbers = #tpu.dot_dimension_numbers<[1], [0], [0], [1], [0, 0, 1, 1], [], []>} : vector<128x128xf32>, vector<128x128xf32>, vector<128x128xf32> -> vector<128x128xf32>
    %16 = vector.shape_cast %15 : vector<128x128xf32> to vector<2x64x128xf32>
    %cst_10 = arith.constant dense<0xFF800000> : vector<2x128xf32>
    %17 = vector.multi_reduction <maximumf>, %16, %cst_10 [1] : vector<2x64x128xf32> to vector<2x128xf32>
    %18 = vector.broadcast %7 : vector<1x128xf32> to vector<2x128xf32>
    %19 = arith.addf %17, %18 : vector<2x128xf32>
    %c264 = arith.constant 264 : index
    %c0_11 = arith.constant 0 : index
    %20 = vector.load %arg1[%c264, %c0_11] : memref<400x128xf32, #tpu.memory_space<vmem>>, vector<128x128xf32>
    %cst_12 = arith.constant dense<0.000000e+00> : vector<2x128xf32>
    %21 = tpu.matmul %19, %20, %cst_12 {dimension_numbers = #tpu.dot_dimension_numbers<[1], [0], [0], [1], [0, 0, 1, 1], [], []>} : vector<2x128xf32>, vector<128x128xf32>, vector<2x128xf32> -> vector<2x128xf32>
    %22 = arith.addf %19, %21 : vector<2x128xf32>
    %c0_13 = arith.constant 0 : index
    %c0_14 = arith.constant 0 : index
    %23 = vector.load %arg2[%c0_13, %c0_14] : memref<2x128xf32, #tpu.memory_space<vmem>>, vector<2x128xf32>
    tpu.vector_store %arg2[%c0_13, %c0_14], %22 {strides = array<i32>} : memref<2x128xf32, #tpu.memory_space<vmem>>, vector<2x128xf32>,
    return
  }
}

</mosaic_0001>

<llo_original>
// kernel: traj_sampler_forward.1
$region0: #{traj_sampler_forward.1}
  #allocation0 [shape = 'u32[]', space=smem, size = 0x4, offset = 0x4, fixed_abs, tag = 'smem constant byte address 0x4 - core index']
  #allocation1 [shape = 'u32[144,128]{1,0:T(1,128)}', space=vmem, size = 0x12000, scoped, tag = 'internal scratch']
  %s0 = inlined_call_operand.vmem [shape: f32[128,8], index: 0, kind: input, shape index: {}]
  %s1 = inlined_call_operand.hbm [shape: f32[400,128], index: 1, kind: input, shape index: {}]
  %s2 = inlined_call_operand.vmem [shape: f32[2,128], index: 2, kind: output, shape index: {}]
  %s3 = sld [smem:[#allocation0]]
  $region22: #{traj_sampler_forward.1} parent=0
    _
  %s5 = ssub.s32 1, %s3
  %s6 = scalar_select 0, %s5, %s3
  $region1: #{traj_sampler_forward.1} parent=0
    #allocation2 [shape = 'u8[204800]{0}', space=vmem, size = 0x32000, scoped, tag = 'input window, operand 1, single buffered']
    #allocation3 [shape = 's32[1]{0}', space=sflag, size = 0x4, scoped, tag = 'scoped memory for traj_sampler_forward.1']
    %7 = vsyncpa [#allocation3], 0
    // Predicated region
    $region2: #{traj_sampler_forward.1} parent=1 // pred_check
      _
    $region3: #{traj_sampler_forward.1} parent=1 // pred_check_branch
      %9 = sbr.rel (0) target = $region5
    $region4: #{traj_sampler_forward.1} parent=1 // pred_region
      _
    $region5: #{traj_sampler_forward.1} parent=1 // pred_fallthru
      _
    // Predicated region
    $region6: #{traj_sampler_forward.1} parent=1 // pred_check
      _
    $region7: #{traj_sampler_forward.1} parent=1 // pred_check_branch
      %11 = sbr.rel (0) target = $region9
    $region8: #{traj_sampler_forward.1} parent=1 // pred_region
      %s13 = ssub.s32 6400, 6400
      %14 = vsyncadd [#allocation3], %s13
      %s15 = sshll.u32 [#allocation2], 4
      %s16 = int_to_ptr.vmem [resolvable:$true] %s15
      %21 = dma.hbm_to_vmem [thread:$0]  %s1, 6400, %s16, [#allocation3], 128, 128, 8
    $region9: #{traj_sampler_forward.1} parent=1 // pred_fallthru
      _
    // Predicated region
    $region10: #{traj_sampler_forward.1} parent=1 // pred_check
      _
    $region11: #{traj_sampler_forward.1} parent=1 // pred_check_branch
      %23 = sbr.rel (0) target = $region13
    $region12: #{traj_sampler_forward.1} parent=1 // pred_region
      %24 = dma.done [#allocation3], 6400
    $region13: #{traj_sampler_forward.1} parent=1 // pred_fallthru
      _
    %v25 = vld [vmem:[%s0] sm:$0xff]
    %v26 = vld [vmem:[%s0 + $0x8] sm:$0xff]
    %v27 = vld [vmem:[%s0 + $0x10] sm:$0xff]
    %v28 = vld [vmem:[%s0 + $0x18] sm:$0xff]
    %v29 = vld [vmem:[%s0 + $0x20] sm:$0xff]
    %v30 = vld [vmem:[%s0 + $0x28] sm:$0xff]
    %v31 = vld [vmem:[%s0 + $0x30] sm:$0xff]
    %v32 = vld [vmem:[%s0 + $0x38] sm:$0xff]
    %v33 = vld [vmem:[%s0 + $0x40] sm:$0xff]
    %v34 = vld [vmem:[%s0 + $0x48] sm:$0xff]
    %v35 = vld [vmem:[%s0 + $0x50] sm:$0xff]
    %v36 = vld [vmem:[%s0 + $0x58] sm:$0xff]
    %v37 = vld [vmem:[%s0 + $0x60] sm:$0xff]
    %v38 = vld [vmem:[%s0 + $0x68] sm:$0xff]
    %v39 = vld [vmem:[%s0 + $0x70] sm:$0xff]
    %v40 = vld [vmem:[%s0 + $0x78] sm:$0xff]
    %v41 = vld [vmem:[#allocation2] sm:$0xff]
    %vm42 = vcmask 64512
    %v44 = vsel %vm42, %v25, 0
    %v47 = vsel %vm42, %v26, 0
    %v50 = vsel %vm42, %v27, 0
    %v53 = vsel %vm42, %v28, 0
    %v56 = vsel %vm42, %v29, 0
    %v59 = vsel %vm42, %v30, 0
    %v62 = vsel %vm42, %v31, 0
    %v65 = vsel %vm42, %v32, 0
    %v68 = vsel %vm42, %v33, 0
    %v71 = vsel %vm42, %v34, 0
    %v74 = vsel %vm42, %v35, 0
    %v77 = vsel %vm42, %v36, 0
    %v80 = vsel %vm42, %v37, 0
    %v83 = vsel %vm42, %v38, 0
    %v86 = vsel %vm42, %v39, 0
    %v89 = vsel %vm42, %v40, 0
    %91 = vmatprep.subr.mxu0 0.0
    %92 = vmatpush1.msra.mxu0 %v41
    %93 = vmatprep.subr.mxu0 0.0
    %94 = vmatpush1.msra.mxu0 0.0
    %95 = vmatprep.subr.mxu0 0.0
    %96 = vmatpush1.msra.mxu0 0.0
    %97 = vmatprep.subr.mxu0 0.0
    %98 = vmatpush1.msra.mxu0 0.0
    %99 = vmatprep.subr.mxu0 0.0
    %100 = vmatpush1.msra.mxu0 0.0
    %101 = vmatprep.subr.mxu0 0.0
    %102 = vmatpush1.msra.mxu0 0.0
    %103 = vmatprep.subr.mxu0 0.0
    %104 = vmatpush1.msra.mxu0 0.0
    %105 = vmatprep.subr.mxu0 0.0
    %106 = vmatpush1.msra.mxu0 0.0
    %107 = vmatprep.subr.mxu0 0.0
    %108 = vmatpush1.msra.mxu0 0.0
    %109 = vmatprep.subr.mxu0 0.0
    %110 = vmatpush1.msra.mxu0 0.0
    %111 = vmatprep.subr.mxu0 0.0
    %112 = vmatpush1.msra.mxu0 0.0
    %113 = vmatprep.subr.mxu0 0.0
    %114 = vmatpush1.msra.mxu0 0.0
    %115 = vmatprep.subr.mxu0 0.0
    %116 = vmatpush1.msra.mxu0 0.0
    %117 = vmatprep.subr.mxu0 0.0
    %118 = vmatpush1.msra.mxu0 0.0
    %119 = vmatprep.subr.mxu0 0.0
    %120 = vmatpush1.msra.mxu0 0.0
    %121 = vmatprep.subr.mxu0 0.0
    %122 = vmatpush1.msra.mxu0 0.0
    %123 = vmatprep.subr.mxu0 0.0
    %124 = vmatpush1.msra.mxu0 0.0
    %125 = vmatprep.subr.mxu0 0.0
    %126 = vmatpush1.msra.mxu0 0.0
    %127 = vmatprep.subr.mxu0 0.0
    %128 = vmatpush1.msra.mxu0 0.0
    %129 = vmatprep.subr.mxu0 0.0
    %130 = vmatpush1.msra.mxu0 0.0
    %131 = vmatprep.subr.mxu0 0.0
    %132 = vmatpush1.msra.mxu0 0.0
    %133 = vmatprep.subr.mxu0 0.0
    %134 = vmatpush1.msra.mxu0 0.0
    %135 = vmatprep.subr.mxu0 0.0
    %136 = vmatpush1.msra.mxu0 0.0
    %137 = vmatprep.subr.mxu0 0.0
    %138 = vmatpush1.msra.mxu0 0.0
    %139 = vmatprep.subr.mxu0 0.0
    %140 = vmatpush1.msra.mxu0 0.0
    %141 = vmatprep.subr.mxu0 0.0
    %142 = vmatpush1.msra.mxu0 0.0
    %143 = vmatprep.subr.mxu0 0.0
    %144 = vmatpush1.msra.mxu0 0.0
    %145 = vmatprep.subr.mxu0 0.0
    %146 = vmatpush1.msra.mxu0 0.0
    %147 = vmatprep.subr.mxu0 0.0
    %148 = vmatpush1.msra.mxu0 0.0
    %149 = vmatprep.subr.mxu0 0.0
    %150 = vmatpush1.msra.mxu0 0.0
    %151 = vmatprep.subr.mxu0 0.0
    %152 = vmatpush1.msra.mxu0 0.0
    %153 = vmatprep.subr.mxu0 0.0
    %154 = vmatpush1.msra.mxu0 0.0
    %155 = vmatprep.mubr.f32.mxu0 0.0
    %156 = vmatmul.mubr.f32.gmra.mrb[0].mxu0 %v44
    %v157 = vpop.f32.mrb[0].mxu0
    %v158 = vadd.f32 0.0, %v157
    %v159 = vpop.f32.mrb[0].mxu0
    %160 = vmatprep.mubr.f32.mxu0 0.0
    %161 = vmatmul.mubr.f32.gmra.mrb[0].mxu0 %v47
    %v162 = vpop.f32.mrb[0].mxu0
    %v163 = vadd.f32 0.0, %v162
    %v164 = vpop.f32.mrb[0].mxu0
    %165 = vmatprep.mubr.f32.mxu0 0.0
    %166 = vmatmul.mubr.f32.gmra.mrb[0].mxu0 %v50
    %v167 = vpop.f32.mrb[0].mxu0
    %v168 = vadd.f32 0.0, %v167
    %v169 = vpop.f32.mrb[0].mxu0
    %170 = vmatprep.mubr.f32.mxu0 0.0
    %171 = vmatmul.mubr.f32.gmra.mrb[0].mxu0 %v53
    %v172 = vpop.f32.mrb[0].mxu0
    %v173 = vadd.f32 0.0, %v172
    %v174 = vpop.f32.mrb[0].mxu0
    %175 = vmatprep.mubr.f32.mxu0 0.0
    %176 = vmatmul.mubr.f32.gmra.mrb[0].mxu0 %v56
    %v177 = vpop.f32.mrb[0].mxu0
    %v178 = vadd.f32 0.0, %v177
    %v179 = vpop.f32.mrb[0].mxu0
    %180 = vmatprep.mubr.f32.mxu0 0.0
    %181 = vmatmul.mubr.f32.gmra.mrb[0].mxu0 %v59
    %v182 = vpop.f32.mrb[0].mxu0
    %v183 = vadd.f32 0.0, %v182
    %v184 = vpop.f32.mrb[0].mxu0
    %185 = vmatprep.mubr.f32.mxu0 0.0
    %186 = vmatmul.mubr.f32.gmra.mrb[0].mxu0 %v62
    %v187 = vpop.f32.mrb[0].mxu0
    %v188 = vadd.f32 0.0, %v187
    %v189 = vpop.f32.mrb[0].mxu0
    %190 = vmatprep.mubr.f32.mxu0 0.0
    %191 = vmatmul.mubr.f32.gmra.mrb[0].mxu0 %v65
    %v192 = vpop.f32.mrb[0].mxu0
    %v193 = vadd.f32 0.0, %v192
    %v194 = vpop.f32.mrb[0].mxu0
    %195 = vmatprep.mubr.f32.mxu0 0.0
    %196 = vmatmul.mubr.f32.gmra.mrb[0].mxu0 %v68
    %v197 = vpop.f32.mrb[0].mxu0
    %v198 = vadd.f32 0.0, %v197
    %v199 = vpop.f32.mrb[0].mxu0
    %200 = vmatprep.mubr.f32.mxu0 0.0
    %201 = vmatmul.mubr.f32.gmra.mrb[0].mxu0 %v71
    %v202 = vpop.f32.mrb[0].mxu0
    %v203 = vadd.f32 0.0, %v202
    %v204 = vpop.f32.mrb[0].mxu0
    %205 = vmatprep.mubr.f32.mxu0 0.0
    %206 = vmatmul.mubr.f32.gmra.mrb[0].mxu0 %v74
    %v207 = vpop.f32.mrb[0].mxu0
    %v208 = vadd.f32 0.0, %v207
    %v209 = vpop.f32.mrb[0].mxu0
    %210 = vmatprep.mubr.f32.mxu0 0.0
    %211 = vmatmul.mubr.f32.gmra.mrb[0].mxu0 %v77
    %v212 = vpop.f32.mrb[0].mxu0
    %v213 = vadd.f32 0.0, %v212
    %v214 = vpop.f32.mrb[0].mxu0
    %215 = vmatprep.mubr.f32.mxu0 0.0
    %216 = vmatmul.mubr.f32.gmra.mrb[0].mxu0 %v80
    %v217 = vpop.f32.mrb[0].mxu0
    %v218 = vadd.f32 0.0, %v217
    %v219 = vpop.f32.mrb[0].mxu0
    %220 = vmatprep.mubr.f32.mxu0 0.0
    %221 = vmatmul.mubr.f32.gmra.mrb[0].mxu0 %v83
    %v222 = vpop.f32.mrb[0].mxu0
    %v223 = vadd.f32 0.0, %v222
    %v224 = vpop.f32.mrb[0].mxu0
    %225 = vmatprep.mubr.f32.mxu0 0.0
    %226 = vmatmul.mubr.f32.gmra.mrb[0].mxu0 %v86
    %v227 = vpop.f32.mrb[0].mxu0
    %v228 = vadd.f32 0.0, %v227
    %v229 = vpop.f32.mrb[0].mxu0
    %230 = vmatprep.mubr.f32.mxu0 0.0
    %231 = vmatmul.mubr.f32.gmra.mrb[0].mxu0 %v89
    %v232 = vpop.f32.mrb[0].mxu0
    %v233 = vadd.f32 0.0, %v232
    %v234 = vpop.f32.mrb[0].mxu0
    %235 = vdwg.mxu0
    %v236 = vmax.f32 %v158, 0.0
    %v237 = vmax.f32 %v163, 0.0
    %v238 = vmax.f32 %v168, 0.0
    %v239 = vmax.f32 %v173, 0.0
    %v240 = vmax.f32 %v178, 0.0
    %v241 = vmax.f32 %v183, 0.0
    %v242 = vmax.f32 %v188, 0.0
    %v243 = vmax.f32 %v193, 0.0
    %v244 = vmax.f32 %v198, 0.0
    %v245 = vmax.f32 %v203, 0.0
    %v246 = vmax.f32 %v208, 0.0
    %v247 = vmax.f32 %v213, 0.0
    %v248 = vmax.f32 %v218, 0.0
    %v249 = vmax.f32 %v223, 0.0
    %v250 = vmax.f32 %v228, 0.0
    %v251 = vmax.f32 %v233, 0.0
    %v252 = vld [vmem:[#allocation2 + $0x188] sm:$0xff]
    %v253 = vld [vmem:[#allocation2 + $0x8] sm:$0xff]
    %v254 = vld [vmem:[#allocation2 + $0x10] sm:$0xff]
    %v255 = vld [vmem:[#allocation2 + $0x18] sm:$0xff]
    %v256 = vld [vmem:[#allocation2 + $0x20] sm:$0xff]
    %v257 = vld [vmem:[#allocation2 + $0x28] sm:$0xff]
    %v258 = vld [vmem:[#allocation2 + $0x30] sm:$0xff]
    %v259 = vld [vmem:[#allocation2 + $0x38] sm:$0xff]
    %v260 = vld [vmem:[#allocation2 + $0x40] sm:$0xff]
    %v261 = vld [vmem:[#allocation2 + $0x48] sm:$0xff]
    %v262 = vld [vmem:[#allocation2 + $0x50] sm:$0xff]
    %v263 = vld [vmem:[#allocation2 + $0x58] sm:$0xff]
    %v264 = vld [vmem:[#allocation2 + $0x60] sm:$0xff]
    %v265 = vld [vmem:[#allocation2 + $0x68] sm:$0xff]
    %v266 = vld [vmem:[#allocation2 + $0x70] sm:$0xff]
    %v267 = vld [vmem:[#allocation2 + $0x78] sm:$0xff]
    %v268 = vld [vmem:[#allocation2 + $0x80] sm:$0xff]
    %v269 = vlaneseq
    %v270 = vshrl.u32 %v269, 7
    %v271 = vsub.s32 0, %v270
    %v272 = vrot.slane %v252, %v271
    %273 = vmatprep.subr.mxu0 0.0
    %274 = vmatpush1.msra.mxu0 %v253
    %275 = vmatprep.subr.mxu0 0.0
    %276 = vmatpush1.msra.mxu0 %v254
    %277 = vmatprep.subr.mxu0 0.0
    %278 = vmatpush1.msra.mxu0 %v255
    %279 = vmatprep.subr.mxu0 0.0
    %280 = vmatpush1.msra.mxu0 %v256
    %281 = vmatprep.subr.mxu0 0.0
    %282 = vmatpush1.msra.mxu0 %v257
    %283 = vmatprep.subr.mxu0 0.0
    %284 = vmatpush1.msra.mxu0 %v258
    %285 = vmatprep.subr.mxu0 0.0
    %286 = vmatpush1.msra.mxu0 %v259
    %287 = vmatprep.subr.mxu0 0.0
    %288 = vmatpush1.msra.mxu0 %v260
    %289 = vmatprep.subr.mxu0 0.0
    %290 = vmatpush1.msra.mxu0 %v261
    %291 = vmatprep.subr.mxu0 0.0
    %292 = vmatpush1.msra.mxu0 %v262
    %293 = vmatprep.subr.mxu0 0.0
    %294 = vmatpush1.msra.mxu0 %v263
    %295 = vmatprep.subr.mxu0 0.0
    %296 = vmatpush1.msra.mxu0 %v264
    %297 = vmatprep.subr.mxu0 0.0
    %298 = vmatpush1.msra.mxu0 %v265
    %299 = vmatprep.subr.mxu0 0.0
    %300 = vmatpush1.msra.mxu0 %v266
    %301 = vmatprep.subr.mxu0 0.0
    %302 = vmatpush1.msra.mxu0 %v267
    %303 = vmatprep.subr.mxu0 0.0
    %304 = vmatpush1.msra.mxu0 %v268
    %305 = vmatprep.subr.mxu0 0.0
    %306 = vmatpush1.msra.mxu0 0.0
    %307 = vmatprep.subr.mxu0 0.0
    %308 = vmatpush1.msra.mxu0 0.0
    %309 = vmatprep.subr.mxu0 0.0
    %310 = vmatpush1.msra.mxu0 0.0
    %311 = vmatprep.subr.mxu0 0.0
    %312 = vmatpush1.msra.mxu0 0.0
    %313 = vmatprep.subr.mxu0 0.0
    %314 = vmatpush1.msra.mxu0 0.0
    %315 = vmatprep.subr.mxu0 0.0
    %316 = vmatpush1.msra.mxu0 0.0
    %317 = vmatprep.subr.mxu0 0.0
    %318 = vmatpush1.msra.mxu0 0.0
    %319 = vmatprep.subr.mxu0 0.0
    %320 = vmatpush1.msra.mxu0 0.0
    %321 = vmatprep.subr.mxu0 0.0
    %322 = vmatpush1.msra.mxu0 0.0
    %323 = vmatprep.subr.mxu0 0.0
    %324 = vmatpush1.msra.mxu0 0.0
    %325 = vmatprep.subr.mxu0 0.0
    %326 = vmatpush1.msra.mxu0 0.0
    %327 = vmatprep.subr.mxu0 0.0
    %328 = vmatpush1.msra.mxu0 0.0
    %329 = vmatprep.subr.mxu0 0.0
    %330 = vmatpush1.msra.mxu0 0.0
    %331 = vmatprep.subr.mxu0 0.0
    %332 = vmatpush1.msra.mxu0 0.0
    %333 = vmatprep.subr.mxu0 0.0
    %334 = vmatpush1.msra.mxu0 0.0
    %335 = vmatprep.subr.mxu0 0.0
    %336 = vmatpush1.msra.mxu0 0.0
    %337 = vmatprep.mubr.f32.mxu0 0.0
    %338 = vmatmul.mubr.f32.gmra.mrb[0].mxu0 %v236
    %v339 = vpop.f32.mrb[0].mxu0
    %v340 = vadd.f32 %v272, %v339
    %v341 = vpop.f32.mrb[0].mxu0
    %342 = vmatprep.mubr.f32.mxu0 0.0
    %343 = vmatmul.mubr.f32.gmra.mrb[0].mxu0 %v237
    %v344 = vpop.f32.mrb[0].mxu0
    %v345 = vadd.f32 %v272, %v344
    %v346 = vpop.f32.mrb[0].mxu0
    %347 = vmatprep.mubr.f32.mxu0 0.0
    %348 = vmatmul.mubr.f32.gmra.mrb[0].mxu0 %v238
    %v349 = vpop.f32.mrb[0].mxu0
    %v350 = vadd.f32 %v272, %v349
    %v351 = vpop.f32.mrb[0].mxu0
    %352 = vmatprep.mubr.f32.mxu0 0.0
    %353 = vmatmul.mubr.f32.gmra.mrb[0].mxu0 %v239
    %v354 = vpop.f32.mrb[0].mxu0
    %v355 = vadd.f32 %v272, %v354
    %v356 = vpop.f32.mrb[0].mxu0
    %357 = vmatprep.mubr.f32.mxu0 0.0
    %358 = vmatmul.mubr.f32.gmra.mrb[0].mxu0 %v240
    %v359 = vpop.f32.mrb[0].mxu0
    %v360 = vadd.f32 %v272, %v359
    %v361 = vpop.f32.mrb[0].mxu0
    %362 = vmatprep.mubr.f32.mxu0 0.0
    %363 = vmatmul.mubr.f32.gmra.mrb[0].mxu0 %v241
    %v364 = vpop.f32.mrb[0].mxu0
    %v365 = vadd.f32 %v272, %v364
    %v366 = vpop.f32.mrb[0].mxu0
    %367 = vmatprep.mubr.f32.mxu0 0.0
    %368 = vmatmul.mubr.f32.gmra.mrb[0].mxu0 %v242
    %v369 = vpop.f32.mrb[0].mxu0
    %v370 = vadd.f32 %v272, %v369
    %v371 = vpop.f32.mrb[0].mxu0
    %372 = vmatprep.mubr.f32.mxu0 0.0
    %373 = vmatmul.mubr.f32.gmra.mrb[0].mxu0 %v243
    %v374 = vpop.f32.mrb[0].mxu0
    %v375 = vadd.f32 %v272, %v374
    %v376 = vpop.f32.mrb[0].mxu0
    %377 = vmatprep.mubr.f32.mxu0 0.0
    %378 = vmatmul.mubr.f32.gmra.mrb[0].mxu0 %v244
    %v379 = vpop.f32.mrb[0].mxu0
    %v380 = vadd.f32 %v272, %v379
    %v381 = vpop.f32.mrb[0].mxu0
    %382 = vmatprep.mubr.f32.mxu0 0.0
    %383 = vmatmul.mubr.f32.gmra.mrb[0].mxu0 %v245
    %v384 = vpop.f32.mrb[0].mxu0
    %v385 = vadd.f32 %v272, %v384
    %v386 = vpop.f32.mrb[0].mxu0
    %387 = vmatprep.mubr.f32.mxu0 0.0
    %388 = vmatmul.mubr.f32.gmra.mrb[0].mxu0 %v246
    %v389 = vpop.f32.mrb[0].mxu0
    %v390 = vadd.f32 %v272, %v389
    %v391 = vpop.f32.mrb[0].mxu0
    %392 = vmatprep.mubr.f32.mxu0 0.0
    %393 = vmatmul.mubr.f32.gmra.mrb[0].mxu0 %v247
    %v394 = vpop.f32.mrb[0].mxu0
    %v395 = vadd.f32 %v272, %v394
    %v396 = vpop.f32.mrb[0].mxu0
    %397 = vmatprep.mubr.f32.mxu0 0.0
    %398 = vmatmul.mubr.f32.gmra.mrb[0].mxu0 %v248
    %v399 = vpop.f32.mrb[0].mxu0
    %v400 = vadd.f32 %v272, %v399
    %v401 = vpop.f32.mrb[0].mxu0
    %402 = vmatprep.mubr.f32.mxu0 0.0
    %403 = vmatmul.mubr.f32.gmra.mrb[0].mxu0 %v249
    %v404 = vpop.f32.mrb[0].mxu0
    %v405 = vadd.f32 %v272, %v404
    %v406 = vpop.f32.mrb[0].mxu0
    %407 = vmatprep.mubr.f32.mxu0 0.0
    %408 = vmatmul.mubr.f32.gmra.mrb[0].mxu0 %v250
    %v409 = vpop.f32.mrb[0].mxu0
    %v410 = vadd.f32 %v272, %v409
    %v411 = vpop.f32.mrb[0].mxu0
    %412 = vmatprep.mubr.f32.mxu0 0.0
    %413 = vmatmul.mubr.f32.gmra.mrb[0].mxu0 %v251
    %v414 = vpop.f32.mrb[0].mxu0
    %v415 = vadd.f32 %v272, %v414
    %v416 = vpop.f32.mrb[0].mxu0
    %417 = vdwg.mxu0
    %v418 = vmax.f32 %v340, 0.0
    %v419 = vmax.f32 %v345, 0.0
    %v420 = vmax.f32 %v350, 0.0
    %v421 = vmax.f32 %v355, 0.0
    %v422 = vmax.f32 %v360, 0.0
    %v423 = vmax.f32 %v365, 0.0
    %v424 = vmax.f32 %v370, 0.0
    %v425 = vmax.f32 %v375, 0.0
    %v426 = vmax.f32 %v380, 0.0
    %v427 = vmax.f32 %v385, 0.0
    %v428 = vmax.f32 %v390, 0.0
    %v429 = vmax.f32 %v395, 0.0
    %v430 = vmax.f32 %v400, 0.0
    %v431 = vmax.f32 %v405, 0.0
    %v432 = vmax.f32 %v410, 0.0
    %v433 = vmax.f32 %v415, 0.0
    %v434 = vld [vmem:[#allocation2 + $0x88] sm:$0xff]
    %v435 = vld [vmem:[#allocation2 + $0x90] sm:$0xff]
    %v436 = vld [vmem:[#allocation2 + $0x98] sm:$0xff]
    %v437 = vld [vmem:[#allocation2 + $0xa0] sm:$0xff]
    %v438 = vld [vmem:[#allocation2 + $0xa8] sm:$0xff]
    %v439 = vld [vmem:[#allocation2 + $0xb0] sm:$0xff]
    %v440 = vld [vmem:[#allocation2 + $0xb8] sm:$0xff]
    %v441 = vld [vmem:[#allocation2 + $0xc0] sm:$0xff]
    %v442 = vld [vmem:[#allocation2 + $0xc8] sm:$0xff]
    %v443 = vld [vmem:[#allocation2 + $0xd0] sm:$0xff]
    %v444 = vld [vmem:[#allocation2 + $0xd8] sm:$0xff]
    %v445 = vld [vmem:[#allocation2 + $0xe0] sm:$0xff]
    %v446 = vld [vmem:[#allocation2 + $0xe8] sm:$0xff]
    %v447 = vld [vmem:[#allocation2 + $0xf0] sm:$0xff]
    %v448 = vld [vmem:[#allocation2 + $0xf8] sm:$0xff]
    %v449 = vld [vmem:[#allocation2 + $0x100] sm:$0xff]
    %450 = vmatprep.subr.mxu0 0.0
    %451 = vmatpush1.msra.mxu0 %v434
    %452 = vmatprep.subr.mxu0 0.0
    %453 = vmatpush1.msra.mxu0 %v435
    %454 = vmatprep.subr.mxu0 0.0
    %455 = vmatpush1.msra.mxu0 %v436
    %456 = vmatprep.subr.mxu0 0.0
    %457 = vmatpush1.msra.mxu0 %v437
    %458 = vmatprep.subr.mxu0 0.0
    %459 = vmatpush1.msra.mxu0 %v438
    %460 = vmatprep.subr.mxu0 0.0
    %461 = vmatpush1.msra.mxu0 %v439
    %462 = vmatprep.subr.mxu0 0.0
    %463 = vmatpush1.msra.mxu0 %v440
    %464 = vmatprep.subr.mxu0 0.0
    %465 = vmatpush1.msra.mxu0 %v441
    %466 = vmatprep.subr.mxu0 0.0
    %467 = vmatpush1.msra.mxu0 %v442
    %468 = vmatprep.subr.mxu0 0.0
    %469 = vmatpush1.msra.mxu0 %v443
    %470 = vmatprep.subr.mxu0 0.0
    %471 = vmatpush1.msra.mxu0 %v444
    %472 = vmatprep.subr.mxu0 0.0
    %473 = vmatpush1.msra.mxu0 %v445
    %474 = vmatprep.subr.mxu0 0.0
    %475 = vmatpush1.msra.mxu0 %v446
    %476 = vmatprep.subr.mxu0 0.0
    %477 = vmatpush1.msra.mxu0 %v447
    %478 = vmatprep.subr.mxu0 0.0
    %479 = vmatpush1.msra.mxu0 %v448
    %480 = vmatprep.subr.mxu0 0.0
    %481 = vmatpush1.msra.mxu0 %v449
    %482 = vmatprep.subr.mxu0 0.0
    %483 = vmatpush1.msra.mxu0 0.0
    %484 = vmatprep.subr.mxu0 0.0
    %485 = vmatpush1.msra.mxu0 0.0
    %486 = vmatprep.subr.mxu0 0.0
    %487 = vmatpush1.msra.mxu0 0.0
    %488 = vmatprep.subr.mxu0 0.0
    %489 = vmatpush1.msra.mxu0 0.0
    %490 = vmatprep.subr.mxu0 0.0
    %491 = vmatpush1.msra.mxu0 0.0
    %492 = vmatprep.subr.mxu0 0.0
    %493 = vmatpush1.msra.mxu0 0.0
    %494 = vmatprep.subr.mxu0 0.0
    %495 = vmatpush1.msra.mxu0 0.0
    %496 = vmatprep.subr.mxu0 0.0
    %497 = vmatpush1.msra.mxu0 0.0
    %498 = vmatprep.subr.mxu0 0.0
    %499 = vmatpush1.msra.mxu0 0.0
    %500 = vmatprep.subr.mxu0 0.0
    %501 = vmatpush1.msra.mxu0 0.0
    %502 = vmatprep.subr.mxu0 0.0
    %503 = vmatpush1.msra.mxu0 0.0
    %504 = vmatprep.subr.mxu0 0.0
    %505 = vmatpush1.msra.mxu0 0.0
    %506 = vmatprep.subr.mxu0 0.0
    %507 = vmatpush1.msra.mxu0 0.0
    %508 = vmatprep.subr.mxu0 0.0
    %509 = vmatpush1.msra.mxu0 0.0
    %510 = vmatprep.subr.mxu0 0.0
    %511 = vmatpush1.msra.mxu0 0.0
    %512 = vmatprep.subr.mxu0 0.0
    %513 = vmatpush1.msra.mxu0 0.0
    %514 = vmatprep.mubr.f32.mxu0 0.0
    %515 = vmatmul.mubr.f32.gmra.mrb[0].mxu0 %v418
    %v516 = vpop.f32.mrb[0].mxu0
    %v517 = vadd.f32 0.0, %v516
    %v518 = vpop.f32.mrb[0].mxu0
    %519 = vmatprep.mubr.f32.mxu0 0.0
    %520 = vmatmul.mubr.f32.gmra.mrb[0].mxu0 %v419
    %v521 = vpop.f32.mrb[0].mxu0
    %v522 = vadd.f32 0.0, %v521
    %v523 = vpop.f32.mrb[0].mxu0
    %524 = vmatprep.mubr.f32.mxu0 0.0
    %525 = vmatmul.mubr.f32.gmra.mrb[0].mxu0 %v420
    %v526 = vpop.f32.mrb[0].mxu0
    %v527 = vadd.f32 0.0, %v526
    %v528 = vpop.f32.mrb[0].mxu0
    %529 = vmatprep.mubr.f32.mxu0 0.0
    %530 = vmatmul.mubr.f32.gmra.mrb[0].mxu0 %v421
    %v531 = vpop.f32.mrb[0].mxu0
    %v532 = vadd.f32 0.0, %v531
    %v533 = vpop.f32.mrb[0].mxu0
    %534 = vmatprep.mubr.f32.mxu0 0.0
    %535 = vmatmul.mubr.f32.gmra.mrb[0].mxu0 %v422
    %v536 = vpop.f32.mrb[0].mxu0
    %v537 = vadd.f32 0.0, %v536
    %v538 = vpop.f32.mrb[0].mxu0
    %539 = vmatprep.mubr.f32.mxu0 0.0
    %540 = vmatmul.mubr.f32.gmra.mrb[0].mxu0 %v423
    %v541 = vpop.f32.mrb[0].mxu0
    %v542 = vadd.f32 0.0, %v541
    %v543 = vpop.f32.mrb[0].mxu0
    %544 = vmatprep.mubr.f32.mxu0 0.0
    %545 = vmatmul.mubr.f32.gmra.mrb[0].mxu0 %v424
    %v546 = vpop.f32.mrb[0].mxu0
    %v547 = vadd.f32 0.0, %v546
    %v548 = vpop.f32.mrb[0].mxu0
    %549 = vmatprep.mubr.f32.mxu0 0.0
    %550 = vmatmul.mubr.f32.gmra.mrb[0].mxu0 %v425
    %v551 = vpop.f32.mrb[0].mxu0
    %v552 = vadd.f32 0.0, %v551
    %v553 = vpop.f32.mrb[0].mxu0
    %554 = vmatprep.mubr.f32.mxu0 0.0
    %555 = vmatmul.mubr.f32.gmra.mrb[0].mxu0 %v426
    %v556 = vpop.f32.mrb[0].mxu0
    %v557 = vadd.f32 0.0, %v556
    %v558 = vpop.f32.mrb[0].mxu0
    %559 = vmatprep.mubr.f32.mxu0 0.0
    %560 = vmatmul.mubr.f32.gmra.mrb[0].mxu0 %v427
    %v561 = vpop.f32.mrb[0].mxu0
    %v562 = vadd.f32 0.0, %v561
    %v563 = vpop.f32.mrb[0].mxu0
    %564 = vmatprep.mubr.f32.mxu0 0.0
    %565 = vmatmul.mubr.f32.gmra.mrb[0].mxu0 %v428
    %v566 = vpop.f32.mrb[0].mxu0
    %v567 = vadd.f32 0.0, %v566
    %v568 = vpop.f32.mrb[0].mxu0
    %569 = vmatprep.mubr.f32.mxu0 0.0
    %570 = vmatmul.mubr.f32.gmra.mrb[0].mxu0 %v429
    %v571 = vpop.f32.mrb[0].mxu0
    %v572 = vadd.f32 0.0, %v571
    %v573 = vpop.f32.mrb[0].mxu0
    %574 = vmatprep.mubr.f32.mxu0 0.0
    %575 = vmatmul.mubr.f32.gmra.mrb[0].mxu0 %v430
    %v576 = vpop.f32.mrb[0].mxu0
    %v577 = vadd.f32 0.0, %v576
    %v578 = vpop.f32.mrb[0].mxu0
    %579 = vmatprep.mubr.f32.mxu0 0.0
    %580 = vmatmul.mubr.f32.gmra.mrb[0].mxu0 %v431
    %v581 = vpop.f32.mrb[0].mxu0
    %v582 = vadd.f32 0.0, %v581
    %v583 = vpop.f32.mrb[0].mxu0
    %584 = vmatprep.mubr.f32.mxu0 0.0
    %585 = vmatmul.mubr.f32.gmra.mrb[0].mxu0 %v432
    %v586 = vpop.f32.mrb[0].mxu0
    %v587 = vadd.f32 0.0, %v586
    %v588 = vpop.f32.mrb[0].mxu0
    %589 = vmatprep.mubr.f32.mxu0 0.0
    %590 = vmatmul.mubr.f32.gmra.mrb[0].mxu0 %v433
    %v591 = vpop.f32.mrb[0].mxu0
    %v592 = vadd.f32 0.0, %v591
    %v593 = vpop.f32.mrb[0].mxu0
    %594 = vdwg.mxu0
    %v595 = vmax.f32 %v517, %v527
    %v596 = vmax.f32 %v522, %v532
    %v597 = vmax.f32 %v595, %v537
    %v598 = vmax.f32 %v596, %v542
    %v599 = vmax.f32 %v597, %v547
    %v600 = vmax.f32 %v598, %v552
    %v601 = vmax.f32 %v599, %v600
    %v602 = vrot.slane %v601, 4
    %v603 = vmax.f32 %v601, %v602
    %v604 = vrot.slane %v603, 2
    %v605 = vmax.f32 %v603, %v604
    %v606 = vrot.slane %v605, 1
    %v607 = vmax.f32 %v605, %v606
    %v608 = vmax.f32 %v557, %v567
    %v609 = vmax.f32 %v562, %v572
    %v610 = vmax.f32 %v608, %v577
    %v611 = vmax.f32 %v609, %v582
    %v612 = vmax.f32 %v610, %v587
    %v613 = vmax.f32 %v611, %v592
    %v614 = vmax.f32 %v612, %v613
    %v615 = vrot.slane %v614, 4
    %v616 = vmax.f32 %v614, %v615
    %v617 = vrot.slane %v616, 2
    %v618 = vmax.f32 %v616, %v617
    %v619 = vrot.slane %v618, 1
    %v620 = vmax.f32 %v618, %v619
    %v621 = vlaneseq
    %v622 = vshrl.u32 %v621, 7
    %v623 = vsub.s32 1, %v622
    %v624 = vrot.slane %v252, %v623
    %v625 = vadd.f32 %v607, %v624
    %v626 = vadd.f32 %v620, %v624
    %v627 = vld [vmem:[#allocation2 + $0x108] sm:$0xff]
    %v628 = vld [vmem:[#allocation2 + $0x110] sm:$0xff]
    %v629 = vld [vmem:[#allocation2 + $0x118] sm:$0xff]
    %v630 = vld [vmem:[#allocation2 + $0x120] sm:$0xff]
    %v631 = vld [vmem:[#allocation2 + $0x128] sm:$0xff]
    %v632 = vld [vmem:[#allocation2 + $0x130] sm:$0xff]
    %v633 = vld [vmem:[#allocation2 + $0x138] sm:$0xff]
    %v634 = vld [vmem:[#allocation2 + $0x140] sm:$0xff]
    %v635 = vld [vmem:[#allocation2 + $0x148] sm:$0xff]
    %v636 = vld [vmem:[#allocation2 + $0x150] sm:$0xff]
    %v637 = vld [vmem:[#allocation2 + $0x158] sm:$0xff]
    %v638 = vld [vmem:[#allocation2 + $0x160] sm:$0xff]
    %v639 = vld [vmem:[#allocation2 + $0x168] sm:$0xff]
    %v640 = vld [vmem:[#allocation2 + $0x170] sm:$0xff]
    %v641 = vld [vmem:[#allocation2 + $0x178] sm:$0xff]
    %v642 = vld [vmem:[#allocation2 + $0x180] sm:$0xff]
    %v645 = vrot.slane %v626, 7
    %vm646 = vcmask 1041409
    %v647 = vsel %vm646, %v645, %v625
    %649 = vmatprep.subr.mxu0 0.0
    %650 = vmatpush1.msra.mxu0 %v627
    %651 = vmatprep.subr.mxu0 0.0
    %652 = vmatpush1.msra.mxu0 %v628
    %653 = vmatprep.subr.mxu0 0.0
    %654 = vmatpush1.msra.mxu0 %v629
    %655 = vmatprep.subr.mxu0 0.0
    %656 = vmatpush1.msra.mxu0 %v630
    %657 = vmatprep.subr.mxu0 0.0
    %658 = vmatpush1.msra.mxu0 %v631
    %659 = vmatprep.subr.mxu0 0.0
    %660 = vmatpush1.msra.mxu0 %v632
    %661 = vmatprep.subr.mxu0 0.0
    %662 = vmatpush1.msra.mxu0 %v633
    %663 = vmatprep.subr.mxu0 0.0
    %664 = vmatpush1.msra.mxu0 %v634
    %665 = vmatprep.subr.mxu0 0.0
    %666 = vmatpush1.msra.mxu0 %v635
    %667 = vmatprep.subr.mxu0 0.0
    %668 = vmatpush1.msra.mxu0 %v636
    %669 = vmatprep.subr.mxu0 0.0
    %670 = vmatpush1.msra.mxu0 %v637
    %671 = vmatprep.subr.mxu0 0.0
    %672 = vmatpush1.msra.mxu0 %v638
    %673 = vmatprep.subr.mxu0 0.0
    %674 = vmatpush1.msra.mxu0 %v639
    %675 = vmatprep.subr.mxu0 0.0
    %676 = vmatpush1.msra.mxu0 %v640
    %677 = vmatprep.subr.mxu0 0.0
    %678 = vmatpush1.msra.mxu0 %v641
    %679 = vmatprep.subr.mxu0 0.0
    %680 = vmatpush1.msra.mxu0 %v642
    %681 = vmatprep.subr.mxu0 0.0
    %682 = vmatpush1.msra.mxu0 0.0
    %683 = vmatprep.subr.mxu0 0.0
    %684 = vmatpush1.msra.mxu0 0.0
    %685 = vmatprep.subr.mxu0 0.0
    %686 = vmatpush1.msra.mxu0 0.0
    %687 = vmatprep.subr.mxu0 0.0
    %688 = vmatpush1.msra.mxu0 0.0
    %689 = vmatprep.subr.mxu0 0.0
    %690 = vmatpush1.msra.mxu0 0.0
    %691 = vmatprep.subr.mxu0 0.0
    %692 = vmatpush1.msra.mxu0 0.0
    %693 = vmatprep.subr.mxu0 0.0
    %694 = vmatpush1.msra.mxu0 0.0
    %695 = vmatprep.subr.mxu0 0.0
    %696 = vmatpush1.msra.mxu0 0.0
    %697 = vmatprep.subr.mxu0 0.0
    %698 = vmatpush1.msra.mxu0 0.0
    %699 = vmatprep.subr.mxu0 0.0
    %700 = vmatpush1.msra.mxu0 0.0
    %701 = vmatprep.subr.mxu0 0.0
    %702 = vmatpush1.msra.mxu0 0.0
    %703 = vmatprep.subr.mxu0 0.0
    %704 = vmatpush1.msra.mxu0 0.0
    %705 = vmatprep.subr.mxu0 0.0
    %706 = vmatpush1.msra.mxu0 0.0
    %707 = vmatprep.subr.mxu0 0.0
    %708 = vmatpush1.msra.mxu0 0.0
    %709 = vmatprep.subr.mxu0 0.0
    %710 = vmatpush1.msra.mxu0 0.0
    %711 = vmatprep.subr.mxu0 0.0
    %712 = vmatpush1.msra.mxu0 0.0
    %713 = vmatprep.mubr.f32.mxu0 0.0
    %714 = vmatmul.mubr.f32.gmra.mrb[0].mxu0 %v647
    %v715 = vpop.f32.mrb[0].mxu0
    %v716 = vadd.f32 0.0, %v715
    %v717 = vpop.f32.mrb[0].mxu0
    %718 = vdwg.mxu0
    %v720 = vrot.slane %v716, 1
    %v723 = vadd.f32 %v625, %v716
    %v724 = vadd.f32 %v626, %v720
    %v727 = vrot.slane %v724, 7
    %v728 = vsel %vm646, %v727, %v723
    %730 = vst [vmem:[%s2] sm:$0x3] %v728
    // Predicated region
    $region14: #{traj_sampler_forward.1} parent=1 // pred_check
      _
    $region15: #{traj_sampler_forward.1} parent=1 // pred_check_branch
      %732 = sbr.rel (0) target = $region17
    $region16: #{traj_sampler_forward.1} parent=1 // pred_region
      _
    $region17: #{traj_sampler_forward.1} parent=1 // pred_fallthru
      _
    // Predicated region
    $region18: #{traj_sampler_forward.1} parent=1 // pred_check
      _
    $region19: #{traj_sampler_forward.1} parent=1 // pred_check_branch
      %734 = sbr.rel (0) target = $region21
    $region20: #{traj_sampler_forward.1} parent=1 // pred_region
      _
    $region21: #{traj_sampler_forward.1} parent=1 // pred_fallthru
      _
    %735 = vsyncpa [#allocation3], 1

</llo_original>
